<compile_context>
chip_gen: v5e
topology: v5e:2x2
jax: 0.10.0
libtpu: 0.0.40
codegen_flags: <defaults>
</compile_context>

<pallas_src>
import functools

import jax
import jax.numpy as jnp
from jax.experimental import pallas as pl
from jax.experimental.pallas import tpu as pltpu


def _attention_pooling_kernel(x_ref, w_ref, o_ref, m_sc, l_sc, acc_sc,
                              *, seq_len, seq_tile, needs_mask):
    # x_ref : (TB, TT, D) native dtype       w_ref : (1, D)
    # o_ref : (TB, D)
    # m_sc, l_sc : (TB, 1) f32 scratch       acc_sc : (TB, D) f32 scratch
    j = pl.program_id(1)

    @pl.when(j == 0)
    def _init():
        m_sc[...] = jnp.full_like(m_sc, -jnp.inf)
        l_sc[...] = jnp.zeros_like(l_sc)
        acc_sc[...] = jnp.zeros_like(acc_sc)

    x = x_ref[...]                           # (TB, TT, D) native dtype (no upcast)
    w = w_ref[...].astype(x.dtype)           # (1, D) lane-dense row, native dtype

    if needs_mask:
        # Tail tile of the cdiv grid: zero padded x rows and force their
        # scores to -inf so they contribute exactly nothing.
        t_idx = j * seq_tile + jax.lax.broadcasted_iota(jnp.int32, (1, seq_tile), 1)
        valid = t_idx < seq_len                                     # (1, TT)
        x = jnp.where(valid[:, :, None], x, jnp.zeros_like(x))

    # scores: native-dtype VPU multiply, f32 accumulation on the lane reduce.
    # NOTE: the nn.Linear bias is one scalar added to every T position; softmax
    # over T is invariant to it, so it is intentionally omitted here.
    scores = jnp.sum(x * w, axis=-1, dtype=jnp.float32)             # (TB, TT)
    if needs_mask:
        scores = jnp.where(valid, scores, -jnp.inf)

    # --- online softmax update over the sequence (T) axis -------------------
    m_prev = m_sc[...]                                              # (TB, 1)
    m_new = jnp.maximum(m_prev, jnp.max(scores, axis=-1, keepdims=True))
    alpha = jnp.exp(m_prev - m_new)                                 # (TB, 1)
    p = jnp.exp(scores - m_new)                                     # (TB, TT), 0 in tail

    l_sc[...] = alpha * l_sc[...] + jnp.sum(p, axis=-1, keepdims=True)

    # Weighted partial sum over this T tile: multiply in x's native dtype,
    # accumulate in f32 scratch (no (TB,TT,D) f32 temporary).
    weighted = p.astype(x.dtype)[:, :, None] * x                    # (TB, TT, D)
    acc_sc[...] = alpha * acc_sc[...] + jnp.sum(weighted, axis=1, dtype=jnp.float32)
    m_sc[...] = m_new

    @pl.when(j == pl.num_programs(1) - 1)
    def _finalize():
        o_ref[...] = (acc_sc[...] * (1.0 / l_sc[...])).astype(o_ref.dtype)


def _largest_aligned_divisor(total, cap, align=8):
    """Largest multiple of `align` that divides `total` and is <= cap, or None."""
    cap = min(cap, total)
    t = (cap // align) * align
    while t >= align:
        if total % t == 0:
            return t
        t -= align
    return None


def attention_pooling(x, w, b=None):
    """x: (B, T, D); w: (1, D) (nn.Linear(D, 1) weight); b: (1,) bias (softmax-
    invariant over T, accepted for interface fidelity but not used in-kernel).

    Returns (B, D) = sum_T softmax(x @ w.T + b, axis=T) * x.
    """
    B, T, D = x.shape
    itemsize = jnp.dtype(x.dtype).itemsize

    # ---- per-generation VMEM budget -----------------------------------------
    try:
        vmem_cap = int(pltpu.get_tpu_info().vmem_capacity_bytes)
    except Exception:
        vmem_cap = 64 << 20                      # assume the smallest (v7x per-TC)
    if vmem_cap >= (100 << 20):                  # v5e / v6e: 128 MiB physical
        x_tile_budget = 16 << 20                 # per pipeline buffer
        vmem_ceiling = 64 << 20
    else:                                        # v7x: 64 MiB per TensorCore
        x_tile_budget = 10 << 20
        vmem_ceiling = 48 << 20

    # ---- batch tile ----------------------------------------------------------
    # Output block is (tb, D): tb must be a multiple of 8 or equal to B.
    if B <= 8:
        tb = B
    else:
        cap = B // 2 if B >= 16 else B           # keep >=2 batch blocks (v7x megacore)
        cap = min(cap, max(8, x_tile_budget // max(1, T * D * itemsize)))
        tb = (_largest_aligned_divisor(B, cap)
              or _largest_aligned_divisor(B, B)
              or B)

    # ---- sequence tile: whole T if it fits the budget, else mult-of-8 + mask -
    tt_cap = max(8, x_tile_budget // max(1, tb * D * itemsize))
    tt = T if T <= tt_cap else (tt_cap // 8) * 8
    num_t_blocks = pl.cdiv(T, tt)
    needs_mask = (T % tt) != 0

    grid = (B // tb, num_t_blocks)

    # ---- VMEM accounting / pipeline depth ------------------------------------
    x_tile_bytes = tb * tt * D * itemsize
    out_tile_bytes = tb * D * itemsize
    scratch_bytes = tb * (D + 2) * 4
    w_bytes = 2 * D * itemsize

    use_triple_buffer = (
        num_t_blocks >= 3
        and (3 * x_tile_bytes + 2 * out_tile_bytes + scratch_bytes + w_bytes
             + (4 << 20)) <= vmem_ceiling
    )
    n_buf = 3 if use_triple_buffer else 2

    vmem_needed = n_buf * x_tile_bytes + 2 * out_tile_bytes + scratch_bytes + w_bytes
    vmem_limit = int(min(vmem_ceiling, max(vmem_needed + (4 << 20), 24 << 20)))

    x_spec_kwargs = {}
    if use_triple_buffer:
        x_spec_kwargs["pipeline_mode"] = pl.Buffered(3)

    kernel = functools.partial(
        _attention_pooling_kernel,
        seq_len=T, seq_tile=tt, needs_mask=needs_mask,
    )

    cost = pl.CostEstimate(
        flops=int(4 * B * T * D),
        transcendentals=int(2 * B * T),
        bytes_accessed=int(B * T * D * itemsize + B * D * itemsize + D * itemsize),
    )

    return pl.pallas_call(
        kernel,
        out_shape=jax.ShapeDtypeStruct((B, D), x.dtype),
        grid=grid,
        in_specs=[
            pl.BlockSpec((tb, tt, D), lambda i, j: (i, j, 0), **x_spec_kwargs),  # x stream
            pl.BlockSpec((1, D), lambda i, j: (0, 0)),                            # weight row (resident)
        ],
        out_specs=pl.BlockSpec((tb, D), lambda i, j: (i, 0)),                     # revisited over j
        scratch_shapes=[
            pltpu.VMEM((tb, 1), jnp.float32),    # running max
            pltpu.VMEM((tb, 1), jnp.float32),    # running denominator
            pltpu.VMEM((tb, D), jnp.float32),    # weighted-sum accumulator
        ],
        compiler_params=pltpu.CompilerParams(
            dimension_semantics=("parallel", "arbitrary"),
            vmem_limit_bytes=vmem_limit,
        ),
        cost_estimate=cost,
    )(x, w)


def reference(x, w, b):
    scores = jnp.einsum("btd,od->bto", x, w) + b          # (B, T, 1)
    attn = jax.nn.softmax(scores, axis=1)
    return jnp.sum(attn * x, axis=1)


if __name__ == "__main__":
    B, T, D = 2, 8, 32  # batch, seq, input_dim

    key = jax.random.PRNGKey(0)
    kx, kw, kb = jax.random.split(key, 3)

    x = jax.random.normal(kx, (B, T, D), dtype=jnp.float32)
    # nn.Linear(input_dim, 1): weight (1, D) lane-dense row, bias (1,).
    w = jax.random.normal(kw, (1, D), dtype=jnp.float32) * (1.0 / jnp.sqrt(D))
    b = jax.random.normal(kb, (1,), dtype=jnp.float32) * 0.1

    out = attention_pooling(x, w, b)
    out = jax.block_until_ready(out)

    ref = reference(x, w, b)
    assert out.shape == (B, D)
    assert jnp.allclose(out, ref, atol=1e-5, rtol=1e-5), (
        f"mismatch: max abs diff {jnp.max(jnp.abs(out - ref))}"
    )

    print("KERNEL_OK")
</pallas_src>

<mosaic_0001>
module attributes {stable_mosaic.version = 11 : i64} {
  func.func @_attention_pooling_kernel(%arg0: i32, %arg1: i32, %arg2: memref<2x8x32xf32, #tpu.memory_space<vmem>>, %arg3: memref<1x32xf32, #tpu.memory_space<vmem>>, %arg4: memref<2x32xf32, #tpu.memory_space<vmem>>, %arg5: memref<2x1xf32, #tpu.memory_space<vmem>>, %arg6: memref<2x1xf32, #tpu.memory_space<vmem>>, %arg7: memref<2x32xf32, #tpu.memory_space<vmem>>) attributes {dimension_semantics = [#tpu.dimension_semantics<parallel>, #tpu.dimension_semantics<arbitrary>], iteration_bounds = array<i64: 1, 1>, scalar_prefetch = 0 : i64, scratch_operands = 3 : i64, tpu.core_type = #tpu.core_type<tc>, window_params = [{transform_indices = @transform_0, window_bounds = array<i64: 2, 8, 32>}, {pipeline_mode = #tpu.pipeline_mode<synchronous>, transform_indices = @transform_1, window_bounds = array<i64: 1, 32>}, {transform_indices = @transform_2, window_bounds = array<i64: 2, 32>}]} {
    %c0_i32 = arith.constant 0 : i32
    %0 = arith.cmpi eq, %arg1, %c0_i32 : i32
    %1 = arith.extui %0 : i1 to i32
    %c0_i32_0 = arith.constant 0 : i32
    %2 = arith.cmpi ne, %1, %c0_i32_0 : i32
    scf.if %2 {
      %cst_22 = arith.constant 0xFF800000 : f32
      %37 = vector.broadcast %cst_22 : f32 to vector<2x1xf32>
      %c0_23 = arith.constant 0 : index
      %c0_24 = arith.constant 0 : index
      %38 = vector.load %arg5[%c0_23, %c0_24] : memref<2x1xf32, #tpu.memory_space<vmem>>, vector<2x1xf32>
      tpu.vector_store %arg5[%c0_23, %c0_24], %37 {strides = array<i32>} : memref<2x1xf32, #tpu.memory_space<vmem>>, vector<2x1xf32>,
      %cst_25 = arith.constant 0.000000e+00 : f32
      %39 = vector.broadcast %cst_25 : f32 to vector<2x1xf32>
      %c0_26 = arith.constant 0 : index
      %c0_27 = arith.constant 0 : index
      %40 = vector.load %arg6[%c0_26, %c0_27] : memref<2x1xf32, #tpu.memory_space<vmem>>, vector<2x1xf32>
      tpu.vector_store %arg6[%c0_26, %c0_27], %39 {strides = array<i32>} : memref<2x1xf32, #tpu.memory_space<vmem>>, vector<2x1xf32>,
      %cst_28 = arith.constant 0.000000e+00 : f32
      %41 = vector.broadcast %cst_28 : f32 to vector<2x32xf32>
      %c0_29 = arith.constant 0 : index
      %c0_30 = arith.constant 0 : index
      %42 = vector.load %arg7[%c0_29, %c0_30] : memref<2x32xf32, #tpu.memory_space<vmem>>, vector<2x32xf32>
      tpu.vector_store %arg7[%c0_29, %c0_30], %41 {strides = array<i32>} : memref<2x32xf32, #tpu.memory_space<vmem>>, vector<2x32xf32>,
    } else {
    }
    %c0 = arith.constant 0 : index
    %c0_1 = arith.constant 0 : index
    %c0_2 = arith.constant 0 : index
    %3 = vector.load %arg2[%c0, %c0_1, %c0_2] : memref<2x8x32xf32, #tpu.memory_space<vmem>>, vector<2x8x32xf32>
    %c0_3 = arith.constant 0 : index
    %c0_4 = arith.constant 0 : index
    %4 = vector.load %arg3[%c0_3, %c0_4] : memref<1x32xf32, #tpu.memory_space<vmem>>, vector<1x32xf32>
    %5 = vector.shape_cast %4 : vector<1x32xf32> to vector<1x1x32xf32>
    %6 = vector.broadcast %5 : vector<1x1x32xf32> to vector<2x8x32xf32>
    %7 = arith.mulf %3, %6 : vector<2x8x32xf32>
    %cst = arith.constant dense<0.000000e+00> : vector<2x8xf32>
    %8 = vector.multi_reduction <add>, %7, %cst [2] : vector<2x8x32xf32> to vector<2x8xf32>
    %c0_5 = arith.constant 0 : index
    %c0_6 = arith.constant 0 : index
    %9 = vector.load %arg5[%c0_5, %c0_6] : memref<2x1xf32, #tpu.memory_space<vmem>>, vector<2x1xf32>
    %cst_7 = arith.constant dense<0xFF800000> : vector<2xf32>
    %10 = vector.multi_reduction <maximumf>, %8, %cst_7 [1] : vector<2x8xf32> to vector<2xf32>
    %11 = vector.shape_cast %10 : vector<2xf32> to vector<2x1xf32>
    %12 = arith.maximumf %9, %11 : vector<2x1xf32>
    %13 = arith.subf %9, %12 : vector<2x1xf32>
    %14 = math.exp %13 : vector<2x1xf32>
    %15 = vector.broadcast %12 : vector<2x1xf32> to vector<2x8xf32>
    %16 = arith.subf %8, %15 : vector<2x8xf32>
    %17 = math.exp %16 : vector<2x8xf32>
    %c0_8 = arith.constant 0 : index
    %c0_9 = arith.constant 0 : index
    %18 = vector.load %arg6[%c0_8, %c0_9] : memref<2x1xf32, #tpu.memory_space<vmem>>, vector<2x1xf32>
    %19 = arith.mulf %14, %18 : vector<2x1xf32>
    %cst_10 = arith.constant dense<0.000000e+00> : vector<2xf32>
    %20 = vector.multi_reduction <add>, %17, %cst_10 [1] : vector<2x8xf32> to vector<2xf32>
    %21 = vector.shape_cast %20 : vector<2xf32> to vector<2x1xf32>
    %22 = arith.addf %19, %21 : vector<2x1xf32>
    %c0_11 = arith.constant 0 : index
    %c0_12 = arith.constant 0 : index
    %23 = vector.load %arg6[%c0_11, %c0_12] : memref<2x1xf32, #tpu.memory_space<vmem>>, vector<2x1xf32>
    tpu.vector_store %arg6[%c0_11, %c0_12], %22 {strides = array<i32>} : memref<2x1xf32, #tpu.memory_space<vmem>>, vector<2x1xf32>,
    %24 = vector.shape_cast %17 : vector<2x8xf32> to vector<2x8x1xf32>
    %25 = vector.broadcast %24 : vector<2x8x1xf32> to vector<2x8x32xf32>
    %26 = arith.mulf %25, %3 : vector<2x8x32xf32>
    %c0_13 = arith.constant 0 : index
    %c0_14 = arith.constant 0 : index
    %27 = vector.load %arg7[%c0_13, %c0_14] : memref<2x32xf32, #tpu.memory_space<vmem>>, vector<2x32xf32>
    %28 = vector.broadcast %14 : vector<2x1xf32> to vector<2x32xf32>
    %29 = arith.mulf %28, %27 : vector<2x32xf32>
    %cst_15 = arith.constant dense<0.000000e+00> : vector<2x32xf32>
    %30 = vector.multi_reduction <add>, %26, %cst_15 [1] : vector<2x8x32xf32> to vector<2x32xf32>
    %31 = arith.addf %29, %30 : vector<2x32xf32>
    %c0_16 = arith.constant 0 : index
    %c0_17 = arith.constant 0 : index
    %32 = vector.load %arg7[%c0_16, %c0_17] : memref<2x32xf32, #tpu.memory_space<vmem>>, vector<2x32xf32>
    tpu.vector_store %arg7[%c0_16, %c0_17], %31 {strides = array<i32>} : memref<2x32xf32, #tpu.memory_space<vmem>>, vector<2x32xf32>,
    %c0_18 = arith.constant 0 : index
    %c0_19 = arith.constant 0 : index
    %33 = vector.load %arg5[%c0_18, %c0_19] : memref<2x1xf32, #tpu.memory_space<vmem>>, vector<2x1xf32>
    tpu.vector_store %arg5[%c0_18, %c0_19], %12 {strides = array<i32>} : memref<2x1xf32, #tpu.memory_space<vmem>>, vector<2x1xf32>,
    %c0_i32_20 = arith.constant 0 : i32
    %34 = arith.cmpi eq, %arg1, %c0_i32_20 : i32
    %35 = arith.extui %34 : i1 to i32
    %c0_i32_21 = arith.constant 0 : i32
    %36 = arith.cmpi ne, %35, %c0_i32_21 : i32
    scf.if %36 {
      %c0_22 = arith.constant 0 : index
      %c0_23 = arith.constant 0 : index
      %37 = vector.load %arg7[%c0_22, %c0_23] : memref<2x32xf32, #tpu.memory_space<vmem>>, vector<2x32xf32>
      %c0_24 = arith.constant 0 : index
      %c0_25 = arith.constant 0 : index
      %38 = vector.load %arg6[%c0_24, %c0_25] : memref<2x1xf32, #tpu.memory_space<vmem>>, vector<2x1xf32>
      %cst_26 = arith.constant 1.000000e+00 : f32
      %39 = vector.broadcast %cst_26 : f32 to vector<2x1xf32>
      %40 = arith.divf %39, %38 : vector<2x1xf32>
      %41 = vector.broadcast %40 : vector<2x1xf32> to vector<2x32xf32>
      %42 = arith.mulf %37, %41 : vector<2x32xf32>
      %c0_27 = arith.constant 0 : index
      %c0_28 = arith.constant 0 : index
      %43 = vector.load %arg4[%c0_27, %c0_28] : memref<2x32xf32, #tpu.memory_space<vmem>>, vector<2x32xf32>
      tpu.vector_store %arg4[%c0_27, %c0_28], %42 {strides = array<i32>} : memref<2x32xf32, #tpu.memory_space<vmem>>, vector<2x32xf32>,
    } else {
    }
    return
  }
  func.func @transform_0(%arg0: i32, %arg1: i32) -> (i32, i32, i32) {
    %c0_i32 = arith.constant 0 : i32
    %c0_i32_0 = arith.constant 0 : i32
    return %arg0, %arg1, %c0_i32 : i32, i32, i32
  }
  func.func @transform_1(%arg0: i32, %arg1: i32) -> (i32, i32) {
    %c0_i32 = arith.constant 0 : i32
    %c0_i32_0 = arith.constant 0 : i32
    %c0_i32_1 = arith.constant 0 : i32
    return %c0_i32, %c0_i32_0 : i32, i32
  }
  func.func @transform_2(%arg0: i32, %arg1: i32) -> (i32, i32) {
    %c0_i32 = arith.constant 0 : i32
    %c0_i32_0 = arith.constant 0 : i32
    return %arg0, %c0_i32 : i32, i32
  }
}

</mosaic_0001>

<llo_original>
// kernel: tpu_custom_call.1
$region0: #{tpu_custom_call.1}
  #allocation0 [shape = 'u32[]', space=smem, size = 0x4, offset = 0x4, fixed_abs, tag = 'smem constant byte address 0x4 - core index']
  #allocation1 [shape = 'u32[72,128]{1,0:T(1,128)}', space=vmem, size = 0x9000, scoped, tag = 'internal scratch']
  #allocation2 [shape = 'f32[2,1]{1,0:T(2,128)}', space=vmem, size = 0x400, scoped, tag = 'scratch operand']
  #allocation3 [shape = 'f32[2,1]{1,0:T(2,128)}', space=vmem, size = 0x400, scoped, tag = 'scratch operand']
  #allocation4 [shape = 'f32[2,32]{1,0:T(2,128)}', space=vmem, size = 0x400, scoped, tag = 'scratch operand']
  %s0 = inlined_call_operand.hbm [shape: f32[2,8,32], index: 0, kind: input, shape index: {}]
  %s1 = inlined_call_operand.hbm [shape: f32[1,32], index: 1, kind: input, shape index: {}]
  %s2 = inlined_call_operand.hbm [shape: f32[2,32], index: 2, kind: output, shape index: {}]
  %s3 = sld [smem:[#allocation0]]
  $region34: #{tpu_custom_call.1} parent=0
    _
  %s5 = ssub.s32 1, %s3
  %s6 = scalar_select 0, %s5, %s3
  $region1: #{tpu_custom_call.1} parent=0
    #allocation5 [shape = 'u8[8192]{0}', space=vmem, size = 0x2000, scoped, tag = 'input window, operand 0, single buffered']
    #allocation6 [shape = 's32[1]{0}', space=sflag, size = 0x4, scoped, tag = 'scoped memory for tpu_custom_call.1']
    #allocation7 [shape = 's32[1]{0}', space=sflag, size = 0x4, scoped, tag = 'scoped memory for tpu_custom_call.1']
    #allocation8 [shape = 'u8[512]{0}', space=vmem, size = 0x400, scoped, tag = 'input window, operand 1, single buffered']
    #allocation9 [shape = 's32[1]{0}', space=sflag, size = 0x4, scoped, tag = 'scoped memory for tpu_custom_call.1']
    #allocation10 [shape = 'u8[1024]{0}', space=vmem, size = 0x400, scoped, tag = 'output window, operand 0, single buffered']
    %7 = vsyncpa [#allocation6], 0
    %8 = vsyncpa [#allocation9], 0
    %9 = vsyncpa [#allocation7], 0
    // Predicated region
    $region2: #{tpu_custom_call.1} parent=1 // pred_check
      _
    $region3: #{tpu_custom_call.1} parent=1 // pred_check_branch
      %11 = sbr.rel (0) target = $region5
    $region4: #{tpu_custom_call.1} parent=1 // pred_region
      %13 = vsyncadd [#allocation6], 0
      %s14 = sshll.u32 %s0, 4
      %s15 = int_to_ptr.hbm [resolvable:$true] %s14
      %s16 = sshll.u32 [#allocation5], 4
      %s17 = int_to_ptr.vmem [resolvable:$true] %s16
      %22 = dma.hbm_to_vmem [thread:$0]  %s15, 256, %s17, [#allocation6], 128, 128, 8
    $region5: #{tpu_custom_call.1} parent=1 // pred_fallthru
      _
    // Predicated region
    $region6: #{tpu_custom_call.1} parent=1 // pred_check
      _
    $region7: #{tpu_custom_call.1} parent=1 // pred_check_branch
      %24 = sbr.rel (0) target = $region9
    $region8: #{tpu_custom_call.1} parent=1 // pred_region
      %26 = vsyncadd [#allocation9], 0
      %s28 = sshll.u32 %s1, 4
      %s29 = int_to_ptr.hbm [resolvable:$true] %s28
      %s30 = sshll.u32 [#allocation8], 4
      %s31 = int_to_ptr.vmem [resolvable:$true] %s30
      %33 = dma.hbm_to_vmem [thread:$0]  %s29, 16, %s31, [#allocation9]
    $region9: #{tpu_custom_call.1} parent=1 // pred_fallthru
      _
    // Predicated region
    $region10: #{tpu_custom_call.1} parent=1 // pred_check
      _
    $region11: #{tpu_custom_call.1} parent=1 // pred_check_branch
      %35 = sbr.rel (0) target = $region13
    $region12: #{tpu_custom_call.1} parent=1 // pred_region
      %37 = dma.done [#allocation6], 256
    $region13: #{tpu_custom_call.1} parent=1 // pred_fallthru
      _
    // Predicated region
    $region14: #{tpu_custom_call.1} parent=1 // pred_check
      _
    $region15: #{tpu_custom_call.1} parent=1 // pred_check_branch
      %39 = sbr.rel (0) target = $region17
    $region16: #{tpu_custom_call.1} parent=1 // pred_region
      %41 = dma.done [#allocation9], 16
    $region17: #{tpu_custom_call.1} parent=1 // pred_fallthru
      _
    %p42 = scmp.eq.s32.totalorder 0, 0
    // Predicated region
    $region18: #{tpu_custom_call.1} parent=1 // pred_check
      %p43 = pneg %p42
    $region19: #{tpu_custom_call.1} parent=1 // pred_check_branch
      %45 = sbr.rel (%p43) target = $region21
    $region20: #{tpu_custom_call.1} parent=1 // pred_region
      %vm46 = vcmask 1024
      %47 = vst.msk [vmem:[#allocation2] sm:$0x3] %vm46, -inf
      %48 = vst.msk [vmem:[#allocation3] sm:$0x3] %vm46, 0.0
      %vm49 = vcmask 254976
      %50 = vst.msk [vmem:[#allocation4] sm:$0x3] %vm49, 0.0
    $region21: #{tpu_custom_call.1} parent=1 // pred_fallthru
      _
    %v51 = vld [vmem:[#allocation5] sm:$0xff]
    %v52 = vld [vmem:[#allocation5 + $0x8] sm:$0xff]
    %v53 = vld [vmem:[#allocation8] sm:$0x1]
    %v55 = vperm.slane %v53, 0
    %v57 = vmul.f32 %v51, %v55
    %v58 = vmul.f32 %v52, %v55
    %vm59 = vcmask 261120
    %v60 = vsel %vm59, %v57, 0.0
    %61 = vadd.xlane.f32.xlu0 %v60
    %v62 = vpop.xlane.xlu0 %61
    %v63 = vsel %vm59, %v58, 0.0
    %64 = vadd.xlane.f32.xlu0 %v63
    %v65 = vpop.xlane.xlu0 %64
    %v66 = vld [vmem:[#allocation2] sm:$0x3]
    %v69 = vlaneseq
    %v70 = vand.u32 %v69, 127
    %v71 = vperm.slane %v62, %v70
    %v72 = vperm.slane %v65, %v70
    %vm73 = vcmask 1041409
    %v74 = vsel %vm73, %v72, %v71
    %vm76 = vcmask 58368
    %v77 = vsel %vm76, %v74, -inf
    %78 = vmax.xlane.f32.xlu0 %v77
    %v79 = vpop.xlane.xlu0 %78
    %v80 = vmax.f32 %v66, %v79
    %v81 = vsub.f32 %v66, %v80
    %v82 = vmul.f32 %v81, 1.442695
    %v83 = vpow.pop %v82
    %85 = vset.pattern.permute.xlu0 0
    %86 = vperm.xlu0 %85, %v80
    %v87 = vpop.permute.xlu0 %86
    %v88 = vperm.slane %v87, 0
    %v89 = vperm.slane %v87, 1
    %v92 = vsub.f32 %v62, %v88
    %v93 = vsub.f32 %v65, %v89
    %v94 = vmul.f32 %v92, 1.442695
    %v95 = vpow.pop %v94
    %v96 = vmul.f32 %v93, 1.442695
    %v97 = vpow.pop %v96
    %v98 = vld [vmem:[#allocation3] sm:$0x3]
    %v99 = vmul.f32 %v83, %v98
    %102 = vset.pattern.permute.xlu0 0
    %103 = vperm.xlu0 %102, %v95
    %v104 = vpop.permute.xlu0 %103
    %105 = vset.pattern.permute.xlu0 0
    %106 = vperm.xlu0 %105, %v97
    %v107 = vpop.permute.xlu0 %106
    %v108 = vperm.slane %v104, %v70
    %v109 = vperm.slane %v107, %v70
    %v110 = vsel %vm73, %v109, %v108
    %v112 = vsel %vm76, %v110, 0.0
    %113 = vadd.xlane.f32.xlu0 %v112
    %v114 = vpop.xlane.xlu0 %113
    %v115 = vadd.f32 %v99, %v114
    %vm116 = vcmask 1024
    %117 = vst.msk [vmem:[#allocation3] sm:$0x3] %vm116, %v115
    %v120 = vmul.f32 %v104, %v51
    %v121 = vmul.f32 %v107, %v52
    %v122 = vld [vmem:[#allocation4] sm:$0x3]
    %124 = vset.pattern.permute.xlu0 0
    %125 = vperm.xlu0 %124, %v83
    %v126 = vpop.permute.xlu0 %125
    %v128 = vmul.f32 %v126, %v122
    %v129 = vsel %vm59, %v120, 0.0
    %v130 = vrot.slane %v129, 4
    %v131 = vadd.f32 %v129, %v130
    %v132 = vrot.slane %v131, 2
    %v133 = vadd.f32 %v131, %v132
    %v134 = vrot.slane %v133, 1
    %v135 = vadd.f32 %v133, %v134
    %v136 = vsel %vm59, %v121, 0.0
    %v137 = vrot.slane %v136, 4
    %v138 = vadd.f32 %v136, %v137
    %v139 = vrot.slane %v138, 2
    %v140 = vadd.f32 %v138, %v139
    %v141 = vrot.slane %v140, 1
    %v142 = vadd.f32 %v140, %v141
    %v145 = vsel %vm73, %v142, %v135
    %v147 = vadd.f32 %v128, %v145
    %vm148 = vcmask 254976
    %149 = vst.msk [vmem:[#allocation4] sm:$0x3] %vm148, %v147
    %150 = vst.msk [vmem:[#allocation2] sm:$0x3] %vm116, %v80
    // Predicated region
    $region22: #{tpu_custom_call.1} parent=1 // pred_check
      %p151 = pneg %p42
    $region23: #{tpu_custom_call.1} parent=1 // pred_check_branch
      %153 = sbr.rel (%p151) target = $region25
    $region24: #{tpu_custom_call.1} parent=1 // pred_region
      %v154 = vld [vmem:[#allocation4] sm:$0x3]
      %v155 = vld [vmem:[#allocation3] sm:$0x3]
      %v156 = vrcp.pop %v155
      %v157 = vmul.f32 %v155, %v156
      %v158 = vsub.f32 1.0, %v157
      %v159 = vmul.f32 %v156, %v158
      %v160 = vadd.f32 %v156, %v159
      %vm161 = vweird.f32 %v155
      %vm162 = vweird.f32 %v156
      %vm163 = vmor %vm161, %vm162
      %v164 = vsel %vm163, %v156, %v160
      %v165 = vand.u32 2147483647, %v155
      %vm166 = vcmp.eq.f32.partialorder %v165, 8.507059e+37
      %v167 = vand.u32 %v155, 2147483648
      %v168 = vor.u32 1.1754944e-38, %v167
      %v169 = vsel %vm166, %v168, %v164
      %v170 = vmul.f32 1.0, %v169
      %172 = vset.pattern.permute.xlu0 0
      %173 = vperm.xlu0 %172, %v170
      %v174 = vpop.permute.xlu0 %173
      %v176 = vmul.f32 %v154, %v174
      %177 = vst.msk [vmem:[#allocation10] sm:$0x3] %vm148, %v176
    $region25: #{tpu_custom_call.1} parent=1 // pred_fallthru
      _
    // Predicated region
    $region26: #{tpu_custom_call.1} parent=1 // pred_check
      _
    $region27: #{tpu_custom_call.1} parent=1 // pred_check_branch
      %179 = sbr.rel (0) target = $region29
    $region28: #{tpu_custom_call.1} parent=1 // pred_region
      %181 = vsyncadd [#allocation7], 0
      %s183 = sshll.u32 [#allocation10], 4
      %s184 = int_to_ptr.vmem [resolvable:$true] %s183
      %s185 = sshll.u32 %s2, 4
      %s186 = int_to_ptr.hbm [resolvable:$true] %s185
      %188 = dma.vmem_to_hbm [thread:$0]  %s184, 32, %s186, [#allocation7]
    $region29: #{tpu_custom_call.1} parent=1 // pred_fallthru
      _
    // Predicated region
    $region30: #{tpu_custom_call.1} parent=1 // pred_check
      _
    $region31: #{tpu_custom_call.1} parent=1 // pred_check_branch
      %190 = sbr.rel (0) target = $region33
    $region32: #{tpu_custom_call.1} parent=1 // pred_region
      %192 = dma.done [#allocation7], 32
    $region33: #{tpu_custom_call.1} parent=1 // pred_fallthru
      _
    %193 = vsyncpa [#allocation6], 1
    %194 = vsyncpa [#allocation9], 1
    %195 = vsyncpa [#allocation7], 1

</llo_original>
